<compile_context>
chip_gen: v7x
topology: tpu7x:2x2x1
jax: 0.10.0
libtpu: 0.0.40
codegen_flags: <defaults>
</compile_context>

<pallas_src>
from typing import NamedTuple

import jax
import jax.numpy as jnp
from jax import lax
from jax.experimental import pallas as pl
from jax.experimental.pallas import tpu as pltpu

HIDDEN = 30      # logical hidden width of the PyTorch module
HID_PAD = 128    # hidden padded to one full lane tile
OUT_PAD = 8      # a_dim padded to one sublane tile (output is stored transposed)


class ActorNetParams(NamedTuple):
    w1: jax.Array    # (s_dim, HID_PAD)    compute dtype (bf16 or f32), zero-padded cols
    b1: jax.Array    # (1, HID_PAD)        f32 row
    w2t: jax.Array   # (OUT_PAD, HID_PAD)  compute dtype, = W2^T zero-padded
    b2: jax.Array    # (OUT_PAD, 1)        f32 column
    a_dim: int


def actor_net_kernel(x_ref, w1_ref, b1_ref, w2t_ref, b2_ref, out_ref):
    cdt = w1_ref.dtype  # MXU operand dtype (bf16 on v6e/v7x fast path, or f32)
    # fc1: (tb, s_dim) @ (s_dim, 128) -> f32 (tb, 128); bias + ReLU in f32 (VPU)
    h = jnp.dot(x_ref[...].astype(cdt), w1_ref[...],
                preferred_element_type=jnp.float32)
    h = jnp.maximum(h + b1_ref[...], 0.0)
    # out layer, transposed:  o_t[j, i] = sum_k w2t[j, k] * h[i, k]  -> (8, tb)
    # (classic A @ B^T contraction; batch ends up lane-dense in the output)
    o_t = lax.dot_general(w2t_ref[...], h.astype(cdt),
                          dimension_numbers=(((1,), (1,)), ((), ())),
                          preferred_element_type=jnp.float32)
    # bias (8,1) column broadcast along lanes, tanh on 8 lanes only, dense store
    out_ref[...] = jnp.tanh(o_t + b2_ref[...]).astype(out_ref.dtype)


def prepare_params(w1, b1, w2, b2, *, compute_dtype=jnp.bfloat16):
    """Pad/transpose/cast the ActorNet parameters ONCE (hoisted out of the call path).

    w1: (s_dim, hidden)   b1: (hidden,) or (1, hidden)
    w2: (hidden, a_dim)   b2: (a_dim,)  or (1, a_dim)
    """
    s_dim, hidden = w1.shape
    a_dim = w2.shape[1]
    b1r = jnp.reshape(b1, (1, hidden)).astype(jnp.float32)
    b2r = jnp.reshape(b2, (a_dim,)).astype(jnp.float32)

    w1p = jnp.zeros((s_dim, HID_PAD), compute_dtype).at[:, :hidden].set(
        w1.astype(compute_dtype))
    b1p = jnp.zeros((1, HID_PAD), jnp.float32).at[:, :hidden].set(b1r)
    # second-layer weight stored transposed: w2t[j, k] = w2[k, j]
    w2t = jnp.zeros((OUT_PAD, HID_PAD), compute_dtype).at[:a_dim, :hidden].set(
        w2.T.astype(compute_dtype))
    b2c = jnp.zeros((OUT_PAD, 1), jnp.float32).at[:a_dim, 0].set(b2r)
    return ActorNetParams(w1p, b1p, w2t, b2c, a_dim)


def _pick_tb(batch, block_b):
    """Batch tile (= lane dim of the transposed output block)."""
    if batch <= 128:
        # Single block equal to the full arrays (any size allowed by Mosaic).
        return batch, 1
    # Lane dim of the (8, tb) output block must be a multiple of 128.
    tb = max(128, (min(block_b, batch) // 128) * 128)
    if pl.cdiv(batch, tb) < 2:
        # Make the "parallel" batch axis >= 2 steps so v7x's 2nd TC has work.
        tb = max(128, ((pl.cdiv(batch, 2) + 127) // 128) * 128)
    return tb, pl.cdiv(batch, tb)


def actor_net_forward(x, params: ActorNetParams, *, block_b=1024):
    """Fused ActorNet forward: tanh(relu(x @ W1 + b1) @ W2 + b2).

    x: (B, s_dim) float (f32 or bf16; cast to the MXU dtype inside the kernel)
    params: output of prepare_params (built once, reused every call)
    returns (B, a_dim) f32
    """
    B, s_dim = x.shape
    a_dim = params.a_dim
    tb, steps = _pick_tb(B, block_b)

    param_bytes = (params.w1.size * params.w1.dtype.itemsize
                   + params.w2t.size * params.w2t.dtype.itemsize
                   + (params.b1.size + params.b2.size) * 4)

    out_t = pl.pallas_call(
        actor_net_kernel,
        out_shape=jax.ShapeDtypeStruct((OUT_PAD, B), jnp.float32),
        grid_spec=pltpu.PrefetchScalarGridSpec(
            num_scalar_prefetch=0,
            grid=(steps,),
            in_specs=[
                pl.BlockSpec((tb, s_dim), lambda i: (i, 0)),        # x (streamed)
                pl.BlockSpec((s_dim, HID_PAD), lambda i: (0, 0)),   # W1 (resident)
                pl.BlockSpec((1, HID_PAD), lambda i: (0, 0)),       # b1 (resident)
                pl.BlockSpec((OUT_PAD, HID_PAD), lambda i: (0, 0)), # W2^T (resident)
                pl.BlockSpec((OUT_PAD, 1), lambda i: (0, 0)),       # b2 (resident)
            ],
            out_specs=pl.BlockSpec((OUT_PAD, tb), lambda i: (0, i)),
        ),
        compiler_params=pltpu.CompilerParams(
            dimension_semantics=("parallel",),  # shard batch across v7x's 2 TCs
        ),
        cost_estimate=pl.CostEstimate(
            flops=2 * B * (s_dim * HID_PAD + HID_PAD * OUT_PAD),
            transcendentals=B * OUT_PAD,
            bytes_accessed=B * (s_dim * x.dtype.itemsize + OUT_PAD * 4) + param_bytes,
        ),
    )(x, params.w1, params.b1, params.w2t, params.b2)

    # Tiny (16 B/row) layout fixup back to the module's (B, a_dim) convention.
    # TODO(synk): if the consumer can take (a_dim, B), skip this transpose/slice.
    return out_t[:a_dim, :].T


def init_params(key, s_dim, a_dim, hidden=HIDDEN):
    """Parameter init mirroring the PyTorch module (weights stored as (in, out))."""
    k1, k2, k3, k4 = jax.random.split(key, 4)
    w1 = (0.1 * jax.random.normal(k1, (hidden, s_dim), jnp.float32)).T   # (s_dim, 30)
    w2 = (0.1 * jax.random.normal(k2, (a_dim, hidden), jnp.float32)).T   # (30, a_dim)
    bound1 = 1.0 / jnp.sqrt(jnp.float32(s_dim))
    bound2 = 1.0 / jnp.sqrt(jnp.float32(hidden))
    b1 = jax.random.uniform(k3, (1, hidden), jnp.float32, -bound1, bound1)
    b2 = jax.random.uniform(k4, (1, a_dim), jnp.float32, -bound2, bound2)
    return w1, b1, w2, b2


def reference_forward(x, w1, b1, w2, b2):
    h = jnp.maximum(x @ w1 + b1, 0.0)
    return jnp.tanh(h @ w2 + b2)


if __name__ == "__main__":
    s_dim, a_dim = 32, 4
    key = jax.random.PRNGKey(0)
    k_params, k_x1, k_x2 = jax.random.split(key, 3)
    w1, b1, w2, b2 = init_params(k_params, s_dim, a_dim)

    # Padded / transposed / cast params built ONCE and reused (perf feedback #1).
    params_bf16 = prepare_params(w1, b1, w2, b2, compute_dtype=jnp.bfloat16)
    params_f32 = prepare_params(w1, b1, w2, b2, compute_dtype=jnp.float32)

    # Case 1: batch=200 -> tb=128, grid=(2,) with a ragged edge block (no jnp.pad),
    # bf16 MXU operands (v6e/v7x fast path) with f32 accumulate/epilogue.
    x1 = jax.random.normal(k_x1, (200, s_dim), jnp.float32)
    act1 = jax.block_until_ready(actor_net_forward(x1, params_bf16))
    ref1 = reference_forward(x1, w1, b1, w2, b2)
    assert act1.shape == (200, a_dim)
    err1 = float(jnp.max(jnp.abs(act1 - ref1)))
    assert bool(jnp.allclose(act1, ref1, atol=3e-2, rtol=0.0)), err1

    # Case 2: small batch=64 -> single full block; f32 MXU path, tight tolerance.
    x2 = jax.random.normal(k_x2, (64, s_dim), jnp.float32)
    act2 = jax.block_until_ready(actor_net_forward(x2, params_f32))
    ref2 = reference_forward(x2, w1, b1, w2, b2)
    assert act2.shape == (64, a_dim)
    assert bool(jnp.allclose(act2, ref2, atol=1e-5, rtol=1e-5))

    print("KERNEL_OK")
</pallas_src>

<mosaic_0001>
module attributes {stable_mosaic.version = 11 : i64} {
  func.func @actor_net_kernel(%arg0: i32, %arg1: memref<128x32xf32, #tpu.memory_space<vmem>>, %arg2: memref<32x128xbf16, #tpu.memory_space<vmem>>, %arg3: memref<1x128xf32, #tpu.memory_space<vmem>>, %arg4: memref<8x128xbf16, #tpu.memory_space<vmem>>, %arg5: memref<8x1xf32, #tpu.memory_space<vmem>>, %arg6: memref<8x128xf32, #tpu.memory_space<vmem>>) attributes {dimension_semantics = [#tpu.dimension_semantics<parallel>], iteration_bounds = array<i64: 2>, scalar_prefetch = 0 : i64, scratch_operands = 0 : i64, tpu.core_type = #tpu.core_type<tc>, window_params = [{transform_indices = @transform_0, window_bounds = array<i64: 128, 32>}, {pipeline_mode = #tpu.pipeline_mode<synchronous>, transform_indices = @transform_1, window_bounds = array<i64: 32, 128>}, {pipeline_mode = #tpu.pipeline_mode<synchronous>, transform_indices = @transform_2, window_bounds = array<i64: 1, 128>}, {pipeline_mode = #tpu.pipeline_mode<synchronous>, transform_indices = @transform_3, window_bounds = array<i64: 8, 128>}, {pipeline_mode = #tpu.pipeline_mode<synchronous>, transform_indices = @transform_4, window_bounds = array<i64: 8, 1>}, {transform_indices = @transform_5, window_bounds = array<i64: 8, 128>}]} {
    %c0 = arith.constant 0 : index
    %c0_0 = arith.constant 0 : index
    %0 = vector.load %arg1[%c0, %c0_0] : memref<128x32xf32, #tpu.memory_space<vmem>>, vector<128x32xf32>
    %1 = arith.truncf %0 : vector<128x32xf32> to vector<128x32xbf16>
    %c0_1 = arith.constant 0 : index
    %c0_2 = arith.constant 0 : index
    %2 = vector.load %arg2[%c0_1, %c0_2] : memref<32x128xbf16, #tpu.memory_space<vmem>>, vector<32x128xbf16>
    %cst = arith.constant dense<0.000000e+00> : vector<128x128xf32>
    %3 = tpu.matmul %1, %2, %cst {dimension_numbers = #tpu.dot_dimension_numbers<[1], [0], [0], [1], [0, 0, 1, 1], [], []>} : vector<128x32xbf16>, vector<32x128xbf16>, vector<128x128xf32> -> vector<128x128xf32>
    %c0_3 = arith.constant 0 : index
    %c0_4 = arith.constant 0 : index
    %4 = vector.load %arg3[%c0_3, %c0_4] : memref<1x128xf32, #tpu.memory_space<vmem>>, vector<1x128xf32>
    %5 = vector.broadcast %4 : vector<1x128xf32> to vector<128x128xf32>
    %6 = arith.addf %3, %5 : vector<128x128xf32>
    %cst_5 = arith.constant 0.000000e+00 : f32
    %7 = vector.broadcast %cst_5 : f32 to vector<128x128xf32>
    %8 = arith.maximumf %6, %7 : vector<128x128xf32>
    %c0_6 = arith.constant 0 : index
    %c0_7 = arith.constant 0 : index
    %9 = vector.load %arg4[%c0_6, %c0_7] : memref<8x128xbf16, #tpu.memory_space<vmem>>, vector<8x128xbf16>
    %10 = arith.truncf %8 : vector<128x128xf32> to vector<128x128xbf16>
    %cst_8 = arith.constant dense<0.000000e+00> : vector<8x128xf32>
    %11 = tpu.matmul %9, %10, %cst_8 {dimension_numbers = #tpu.dot_dimension_numbers<[1], [1], [0], [0], [0, 0, 1, 0], [], []>} : vector<8x128xbf16>, vector<128x128xbf16>, vector<8x128xf32> -> vector<8x128xf32>
    %c0_9 = arith.constant 0 : index
    %c0_10 = arith.constant 0 : index
    %12 = vector.load %arg5[%c0_9, %c0_10] : memref<8x1xf32, #tpu.memory_space<vmem>>, vector<8x1xf32>
    %13 = vector.broadcast %12 : vector<8x1xf32> to vector<8x128xf32>
    %14 = arith.addf %11, %13 : vector<8x128xf32>
    %15 = math.tanh %14 : vector<8x128xf32>
    %c0_11 = arith.constant 0 : index
    %c0_12 = arith.constant 0 : index
    %16 = vector.load %arg6[%c0_11, %c0_12] : memref<8x128xf32, #tpu.memory_space<vmem>>, vector<8x128xf32>
    tpu.vector_store %arg6[%c0_11, %c0_12], %15 {strides = array<i32>} : memref<8x128xf32, #tpu.memory_space<vmem>>, vector<8x128xf32>,
    return
  }
  func.func @transform_0(%arg0: i32) -> (i32, i32) {
    %c0_i32 = arith.constant 0 : i32
    %c0_i32_0 = arith.constant 0 : i32
    return %arg0, %c0_i32 : i32, i32
  }
  func.func @transform_1(%arg0: i32) -> (i32, i32) {
    %c0_i32 = arith.constant 0 : i32
    %c0_i32_0 = arith.constant 0 : i32
    %c0_i32_1 = arith.constant 0 : i32
    return %c0_i32, %c0_i32_0 : i32, i32
  }
  func.func @transform_2(%arg0: i32) -> (i32, i32) {
    %c0_i32 = arith.constant 0 : i32
    %c0_i32_0 = arith.constant 0 : i32
    %c0_i32_1 = arith.constant 0 : i32
    return %c0_i32, %c0_i32_0 : i32, i32
  }
  func.func @transform_3(%arg0: i32) -> (i32, i32) {
    %c0_i32 = arith.constant 0 : i32
    %c0_i32_0 = arith.constant 0 : i32
    %c0_i32_1 = arith.constant 0 : i32
    return %c0_i32, %c0_i32_0 : i32, i32
  }
  func.func @transform_4(%arg0: i32) -> (i32, i32) {
    %c0_i32 = arith.constant 0 : i32
    %c0_i32_0 = arith.constant 0 : i32
    %c0_i32_1 = arith.constant 0 : i32
    return %c0_i32, %c0_i32_0 : i32, i32
  }
  func.func @transform_5(%arg0: i32) -> (i32, i32) {
    %c0_i32 = arith.constant 0 : i32
    %c0_i32_0 = arith.constant 0 : i32
    return %c0_i32, %arg0 : i32, i32
  }
}

</mosaic_0001>

<llo_original>
// kernel: tpu_custom_call.1
$region0: #{tpu_custom_call.1}
  #allocation0 [shape = 'u32[]', space=smem, size = 0x4, offset = 0x4, fixed_abs, tag = 'smem constant byte address 0x4 - core index']
  #allocation1 [shape = 'u32[144,128]{1,0:T(1,128)}', space=vmem, size = 0x12000, scoped, tag = 'internal scratch']
  %s0 = inlined_call_operand.vmem [shape: f32[200,32], index: 0, kind: input, shape index: {}]
  %s1 = inlined_call_operand.vmem [shape: bf16[32,128], index: 1, kind: input, shape index: {}]
  %s2 = inlined_call_operand.vmem [shape: f32[1,128], index: 2, kind: input, shape index: {}]
  %s3 = inlined_call_operand.vmem [shape: bf16[8,128], index: 3, kind: input, shape index: {}]
  %s4 = inlined_call_operand.vmem [shape: f32[8,1], index: 4, kind: input, shape index: {}]
  %s5 = inlined_call_operand.hbm [shape: f32[8,200], index: 5, kind: output, shape index: {}]
  %s6 = sld [smem:[#allocation0]]
  $region53: #{tpu_custom_call.1} parent=0
    _
  %s8 = ssub.s32 1, %s6
  %s9 = scalar_select 0, %s8, %s6
  $region1: #{tpu_custom_call.1} parent=0
    #allocation2 [shape = 'u8[8192]{0}', space=vmem, size = 0x2000, scoped, tag = 'output window, operand 0']
    #allocation3 [shape = 's32[2]{0}', space=sflag, size = 0x8, scoped, tag = 'scoped memory for tpu_custom_call.1']
    %10 = vsyncpa [#allocation3], 0
    %s11 = scalar_lea.sflag [#allocation3], 1
    %12 = vsyncpa %s11, 0
    loop: start=0, step=1, limit=4
    $region2: #{tpu_custom_call.1} parent=1 // loop_pre_header
      _
    $region3: #{tpu_custom_call.1} parent=1 // loop_header
      %s14 = sphi 0, %s18
      %p15 = scmp.ge.s32.totalorder %s14, 4
      %s24 = sphi 0, %s26
      %s27 = sphi 0, %s24
      %s28 = sphi 0, %s27
      %s44 = sphi 0, %s28
      %s48 = sphi 0, %s48
      %s50 = sphi 0, %s48
      %s51 = sphi 0, %s50
      %s65 = sphi 0, %s51
      %s69 = sphi 0, %s69
      %s71 = sphi 0, %s69
      %s72 = sphi 0, %s71
      %s86 = sphi 0, %s72
      %s90 = sphi 0, %s90
      %s92 = sphi 0, %s90
      %s93 = sphi 0, %s92
      %s107 = sphi 0, %s93
      %s111 = sphi 0, %s111
      %s113 = sphi 0, %s111
      %s114 = sphi 0, %s113
      %s128 = sphi 0, %s114
      %s134 = sphi 0, %s136
      %s137 = sphi 0, %s134
      %s138 = sphi 0, %s137
      %s154 = sphi 0, %s138
    $region4: #{tpu_custom_call.1} parent=1 // loop_header_branch
      %17 = sbr.rel (%p15) target = $region8
    $region5: #{tpu_custom_call.1} parent=1 // loop_body
      %s19 = ssub.s32 %s14, 1
      %s20 = ssub.s32 %s14, 2
      %s21 = sadd.s32 %s14, 1
      %s22 = ssub.s32 %s14, %s21
      %p23 = scmp.eq.s32.totalorder %s22, 0
      %s25 = sadd.s32 %s24, 1
      %s26 = scalar_select %p23, %s24, %s25
      %p29 = pneg %p23
      %p30 = scmp.eq.s32.totalorder %s14, 1
      %p31 = por %p29, %p30
      %p32 = scmp.ne.s32.totalorder %s24, %s27
      %p33 = scmp.eq.s32.totalorder %s14, 0
      %p34 = por %p32, %p33
      %p35 = scmp.ne.s32.totalorder %s24, %s27
      %p36 = scmp.eq.s32.totalorder %s19, 1
      %p37 = por %p35, %p36
      %p38 = scmp.ne.s32.totalorder %s27, %s28
      %p39 = scmp.eq.s32.totalorder %s19, 0
      %p40 = por %p38, %p39
      %p41 = scmp.ne.s32.totalorder %s27, %s28
      %p42 = scmp.eq.s32.totalorder %s20, 1
      %p43 = por %p41, %p42
      %p45 = scmp.ne.s32.totalorder %s28, %s44
      %p46 = scmp.eq.s32.totalorder %s20, 0
      %p47 = por %p45, %p46
      %s49 = sadd.s32 %s48, 1
      %p52 = scmp.eq.s32.totalorder %s14, 1
      %p53 = scmp.ne.s32.totalorder %s48, %s50
      %p54 = scmp.eq.s32.totalorder %s14, 0
      %p55 = por %p53, %p54
      %p56 = scmp.ne.s32.totalorder %s48, %s50
      %p57 = scmp.eq.s32.totalorder %s19, 1
      %p58 = por %p56, %p57
      %p59 = scmp.ne.s32.totalorder %s50, %s51
      %p60 = scmp.eq.s32.totalorder %s19, 0
      %p61 = por %p59, %p60
      %p62 = scmp.ne.s32.totalorder %s50, %s51
      %p63 = scmp.eq.s32.totalorder %s20, 1
      %p64 = por %p62, %p63
      %p66 = scmp.ne.s32.totalorder %s51, %s65
      %p67 = scmp.eq.s32.totalorder %s20, 0
      %p68 = por %p66, %p67
      %s70 = sadd.s32 %s69, 1
      %p73 = scmp.eq.s32.totalorder %s14, 1
      %p74 = scmp.ne.s32.totalorder %s69, %s71
      %p75 = scmp.eq.s32.totalorder %s14, 0
      %p76 = por %p74, %p75
      %p77 = scmp.ne.s32.totalorder %s69, %s71
      %p78 = scmp.eq.s32.totalorder %s19, 1
      %p79 = por %p77, %p78
      %p80 = scmp.ne.s32.totalorder %s71, %s72
      %p81 = scmp.eq.s32.totalorder %s19, 0
      %p82 = por %p80, %p81
      %p83 = scmp.ne.s32.totalorder %s71, %s72
      %p84 = scmp.eq.s32.totalorder %s20, 1
      %p85 = por %p83, %p84
      %p87 = scmp.ne.s32.totalorder %s72, %s86
      %p88 = scmp.eq.s32.totalorder %s20, 0
      %p89 = por %p87, %p88
      %s91 = sadd.s32 %s90, 1
      %p94 = scmp.eq.s32.totalorder %s14, 1
      %p95 = scmp.ne.s32.totalorder %s90, %s92
      %p96 = scmp.eq.s32.totalorder %s14, 0
      %p97 = por %p95, %p96
      %p98 = scmp.ne.s32.totalorder %s90, %s92
      %p99 = scmp.eq.s32.totalorder %s19, 1
      %p100 = por %p98, %p99
      %p101 = scmp.ne.s32.totalorder %s92, %s93
      %p102 = scmp.eq.s32.totalorder %s19, 0
      %p103 = por %p101, %p102
      %p104 = scmp.ne.s32.totalorder %s92, %s93
      %p105 = scmp.eq.s32.totalorder %s20, 1
      %p106 = por %p104, %p105
      %p108 = scmp.ne.s32.totalorder %s93, %s107
      %p109 = scmp.eq.s32.totalorder %s20, 0
      %p110 = por %p108, %p109
      %s112 = sadd.s32 %s111, 1
      %p115 = scmp.eq.s32.totalorder %s14, 1
      %p116 = scmp.ne.s32.totalorder %s111, %s113
      %p117 = scmp.eq.s32.totalorder %s14, 0
      %p118 = por %p116, %p117
      %p119 = scmp.ne.s32.totalorder %s111, %s113
      %p120 = scmp.eq.s32.totalorder %s19, 1
      %p121 = por %p119, %p120
      %p122 = scmp.ne.s32.totalorder %s113, %s114
      %p123 = scmp.eq.s32.totalorder %s19, 0
      %p124 = por %p122, %p123
      %p125 = scmp.ne.s32.totalorder %s113, %s114
      %p126 = scmp.eq.s32.totalorder %s20, 1
      %p127 = por %p125, %p126
      %p129 = scmp.ne.s32.totalorder %s114, %s128
      %p130 = scmp.eq.s32.totalorder %s20, 0
      %p131 = por %p129, %p130
      %s132 = ssub.s32 %s14, %s21
      %p133 = scmp.eq.s32.totalorder %s132, 0
      %s135 = sadd.s32 %s134, 1
      %s136 = scalar_select %p133, %s134, %s135
      %p139 = pneg %p133
      %p140 = scmp.eq.s32.totalorder %s14, 1
      %p141 = por %p139, %p140
      %p142 = scmp.ne.s32.totalorder %s134, %s137
      %p143 = scmp.eq.s32.totalorder %s14, 0
      %p144 = por %p142, %p143
      %p145 = scmp.ne.s32.totalorder %s134, %s137
      %p146 = scmp.eq.s32.totalorder %s19, 1
      %p147 = por %p145, %p146
      %p148 = scmp.ne.s32.totalorder %s137, %s138
      %p149 = scmp.eq.s32.totalorder %s19, 0
      %p150 = por %p148, %p149
      %p151 = scmp.ne.s32.totalorder %s137, %s138
      %p152 = scmp.eq.s32.totalorder %s20, 1
      %p153 = por %p151, %p152
      %p155 = scmp.ne.s32.totalorder %s138, %s154
      %p156 = scmp.eq.s32.totalorder %s20, 0
      %p157 = por %p155, %p156
      %p158 = scmp.le.s32.totalorder 1, %s14
      %p159 = scmp.lt.s32.totalorder %s14, 3
      %p160 = pnand %p158, %p159
      %p161 = pneg %p160
      // Predicated region
      $region9: #{tpu_custom_call.1} parent=5 // pred_check
        _
      $region10: #{tpu_custom_call.1} parent=5 // pred_check_branch
        %163 = sbr.rel (%p160) target = $region12
      $region11: #{tpu_custom_call.1} parent=5 // pred_region
        %s164 = ssub.s32 %s14, 1
        // Predicated region
        $region13: #{tpu_custom_call.1} parent=11 // pred_check
          %p165 = pneg %p61
        $region14: #{tpu_custom_call.1} parent=11 // pred_check_branch
          %167 = sbr.rel (%p165) target = $region16
        $region15: #{tpu_custom_call.1} parent=11 // pred_region
          _
        $region16: #{tpu_custom_call.1} parent=11 // pred_fallthru
          _
        // Predicated region
        $region17: #{tpu_custom_call.1} parent=11 // pred_check
          %p168 = pneg %p82
        $region18: #{tpu_custom_call.1} parent=11 // pred_check_branch
          %170 = sbr.rel (%p168) target = $region20
        $region19: #{tpu_custom_call.1} parent=11 // pred_region
          _
        $region20: #{tpu_custom_call.1} parent=11 // pred_fallthru
          _
        // Predicated region
        $region21: #{tpu_custom_call.1} parent=11 // pred_check
          %p171 = pneg %p103
        $region22: #{tpu_custom_call.1} parent=11 // pred_check_branch
          %173 = sbr.rel (%p171) target = $region24
        $region23: #{tpu_custom_call.1} parent=11 // pred_region
          _
        $region24: #{tpu_custom_call.1} parent=11 // pred_fallthru
          _
        // Predicated region
        $region25: #{tpu_custom_call.1} parent=11 // pred_check
          %p174 = pneg %p124
        $region26: #{tpu_custom_call.1} parent=11 // pred_check_branch
          %176 = sbr.rel (%p174) target = $region28
        $region27: #{tpu_custom_call.1} parent=11 // pred_region
          _
        $region28: #{tpu_custom_call.1} parent=11 // pred_fallthru
          _
      $region12: #{tpu_custom_call.1} parent=5 // pred_fallthru
        _
      %p177 = scmp.lt.s32.totalorder %s14, 2
      // Predicated region
      $region29: #{tpu_custom_call.1} parent=5 // pred_check
        %p178 = pneg %p177
      $region30: #{tpu_custom_call.1} parent=5 // pred_check_branch
        %180 = sbr.rel (%p178) target = $region32
      $region31: #{tpu_custom_call.1} parent=5 // pred_region
        // Predicated region
        $region33: #{tpu_custom_call.1} parent=31 // pred_check
          %p181 = pneg %p34
        $region34: #{tpu_custom_call.1} parent=31 // pred_check_branch
          %183 = sbr.rel (%p181) target = $region36
        $region35: #{tpu_custom_call.1} parent=31 // pred_region
          %s184 = smul.u32 16, %s14
          %s185 = ssub.s32 25, %s184
          %p186 = scmp.lt.s32.totalorder %s185, 16
          %s187 = scalar_select %p186, %s185, 16
          %s188 = smul.u32 128, %s187
          %p189 = scmp.lt.s32.totalorder %s184, 24
          %s190 = scalar_select %p189, %s184, 24
          %s191 = smul.addr %s190, 8
          %s192 = scalar_lea.vmem %s0, %s191
          %s193 = smul.u32 16, %s14
          %s194 = ssub.s32 25, %s193
          %p195 = scmp.lt.s32.totalorder %s194, 16
          %s196 = scalar_select %p195, %s194, 16
          %s197 = smul.u32 128, %s196
        $region36: #{tpu_custom_call.1} parent=31 // pred_fallthru
          _
      $region32: #{tpu_custom_call.1} parent=5 // pred_fallthru
        _
      %p198 = scmp.le.s32.totalorder 1, %s14
      %p199 = scmp.lt.s32.totalorder %s14, 3
      %p200 = pnand %p198, %p199
      %p201 = pneg %p200
      // Predicated region
      $region37: #{tpu_custom_call.1} parent=5 // pred_check
        _
      $region38: #{tpu_custom_call.1} parent=5 // pred_check_branch
        %203 = sbr.rel (%p200) target = $region40
      $region39: #{tpu_custom_call.1} parent=5 // pred_region
        %s204 = ssub.s32 %s14, 1
        %s205 = smul.u32 16, %s19
        %s206 = ssub.s32 25, %s205
        %p207 = scmp.lt.s32.totalorder %s206, 16
        %s208 = scalar_select %p207, %s206, 16
        %s209 = smul.u32 128, %s208
        %p210 = scmp.lt.s32.totalorder %s205, 24
        %s211 = scalar_select %p210, %s205, 24
        %s212 = smul.addr %s211, 8
        %s213 = scalar_lea.vmem %s0, %s212
        %p214 = pneg %p40
        %p215 = pneg %p37
        %p216 = pneg %p61
        %p217 = pneg %p58
        %p218 = pneg %p82
        %p219 = pneg %p79
        %p220 = pneg %p103
        %p221 = pneg %p100
        %p222 = pneg %p124
        %p223 = pneg %p121
        %p224 = pneg %p150
        %p225 = pneg %p147
        %s226 = sand.u32 %s137, 1
        %s227 = scalar_lea.sflag [#allocation3], %s226
        %s228 = sand.u32 %s137, 1
        %s229 = smul.addr %s228, 8
        %s230 = scalar_lea.vmem [#allocation2], %s229
        %s231 = smul.u32 16, %s19
        %s232 = ssub.s32 25, %s231
        %p233 = scmp.lt.s32.totalorder %s232, 16
        %s234 = scalar_select %p233, %s232, 16
        %s235 = smul.u32 128, %s234
        %p236 = scmp.lt.s32.totalorder %s231, 24
        %s237 = scalar_select %p236, %s231, 24
        %s238 = smul.addr %s237, 8
        %s239 = scalar_lea.vmem %s0, %s238
        %s240 = smul.u32 16, %s19
        %s241 = ssub.s32 25, %s240
        %p242 = scmp.lt.s32.totalorder %s241, 16
        %s243 = scalar_select %p242, %s241, 16
        %s244 = smul.u32 128, %s243
        %v246 = vld [vmem:[%s239] sm:$0xff]
        %v247 = vld [vmem:[%s239 + $0x8] sm:$0xff]
        %v248 = vld [vmem:[%s239 + $0x10] sm:$0xff]
        %v249 = vld [vmem:[%s239 + $0x18] sm:$0xff]
        %v250 = vld [vmem:[%s239 + $0x20] sm:$0xff]
        %v251 = vld [vmem:[%s239 + $0x28] sm:$0xff]
        %v252 = vld [vmem:[%s239 + $0x30] sm:$0xff]
        %v253 = vld [vmem:[%s239 + $0x38] sm:$0xff]
        %v254 = vld [vmem:[%s239 + $0x40] sm:$0xff]
        %v255 = vld [vmem:[%s239 + $0x48] sm:$0xff]
        %v256 = vld [vmem:[%s239 + $0x50] sm:$0xff]
        %v257 = vld [vmem:[%s239 + $0x58] sm:$0xff]
        %v258 = vld [vmem:[%s239 + $0x60] sm:$0xff]
        %v259 = vld [vmem:[%s239 + $0x68] sm:$0xff]
        %v260 = vld [vmem:[%s239 + $0x70] sm:$0xff]
        %v261 = vld [vmem:[%s239 + $0x78] sm:$0xff]
        %v262 = vpack.c.bf16 %v247, %v246
        %v263 = vpack.c.bf16 %v249, %v248
        %v264 = vpack.c.bf16 %v251, %v250
        %v265 = vpack.c.bf16 %v253, %v252
        %v266 = vpack.c.bf16 %v255, %v254
        %v267 = vpack.c.bf16 %v257, %v256
        %v268 = vpack.c.bf16 %v259, %v258
        %v269 = vpack.c.bf16 %v261, %v260
        %v270 = vld [vmem:[%s1] sm:$0xf]
        %v271 = vld [vmem:[%s1 + $0x4] sm:$0xf]
        %v272 = vld [vmem:[%s1 + $0x8] sm:$0xf]
        %v273 = vld [vmem:[%s1 + $0xc] sm:$0xf]
        %v274 = vld [vmem:[%s2] sm:$0x1]
        %v276 = vlaneseq
        %v277 = vshrl.u32 %v276, 7
        %v278 = vsub.s32 0, %v277
        %v279 = vrot.slane %v274, %v278
        %v285 = vunpack.c.l.b16 %v270
        %v286 = vunpack.c.l.b16 %v271
        %v287 = vunpack.c.l.b16 %v272
        %v288 = vunpack.c.l.b16 %v273
        %v289 = vpack.c.b16 %v286, %v285
        %v290 = vpack.c.b16 %v288, %v287
        %vm293 = vcmask 261120
        %v295 = vsel %vm293, %v262, 0
        %v298 = vsel %vm293, %v263, 0
        %v301 = vsel %vm293, %v264, 0
        %v304 = vsel %vm293, %v265, 0
        %v307 = vsel %vm293, %v266, 0
        %v310 = vsel %vm293, %v267, 0
        %v313 = vsel %vm293, %v268, 0
        %v316 = vsel %vm293, %v269, 0
        %318 = vmatprep.subr.bf16.mxu0 0
        %319 = vmatpush1.bf16.msra.mxu0 %v289
        %320 = vmatprep.subr.bf16.mxu0 0
        %321 = vmatpush1.bf16.msra.mxu0 %v290
        %322 = vmatprep.subr.bf16.mxu0 0
        %323 = vmatpush1.bf16.msra.mxu0 0
        %324 = vmatprep.subr.bf16.mxu0 0
        %325 = vmatpush1.bf16.msra.mxu0 0
        %326 = vmatprep.subr.bf16.mxu0 0
        %327 = vmatpush1.bf16.msra.mxu0 0
        %328 = vmatprep.subr.bf16.mxu0 0
        %329 = vmatpush1.bf16.msra.mxu0 0
        %330 = vmatprep.subr.bf16.mxu0 0
        %331 = vmatpush1.bf16.msra.mxu0 0
        %332 = vmatprep.subr.bf16.mxu0 0
        %333 = vmatpush1.bf16.msra.mxu0 0
        %334 = vmatprep.subr.bf16.mxu0 0
        %335 = vmatpush1.bf16.msra.mxu0 0
        %336 = vmatprep.subr.bf16.mxu0 0
        %337 = vmatpush1.bf16.msra.mxu0 0
        %338 = vmatprep.subr.bf16.mxu0 0
        %339 = vmatpush1.bf16.msra.mxu0 0
        %340 = vmatprep.subr.bf16.mxu0 0
        %341 = vmatpush1.bf16.msra.mxu0 0
        %342 = vmatprep.subr.bf16.mxu0 0
        %343 = vmatpush1.bf16.msra.mxu0 0
        %344 = vmatprep.subr.bf16.mxu0 0
        %345 = vmatpush1.bf16.msra.mxu0 0
        %346 = vmatprep.subr.bf16.mxu0 0
        %347 = vmatpush1.bf16.msra.mxu0 0
        %348 = vmatprep.subr.bf16.mxu0 0
        %349 = vmatpush1.bf16.msra.mxu0 0
        %350 = vmatprep.mubr.bf16.mxu0 0
        %351 = vmatmul.mubr.bf16.gmra.mrb[0].mxu0 %v295
        %v352 = vpop.f32.mrb[0].mxu0
        %v353 = vadd.f32 %v279, %v352
        %v354 = vpop.f32.mrb[0].mxu0
        %v355 = vpop.f32.mrb[0].mxu0
        %v356 = vadd.f32 %v279, %v355
        %v357 = vpop.f32.mrb[0].mxu0
        %358 = vmatprep.mubr.bf16.mxu0 0
        %359 = vmatmul.mubr.bf16.gmra.mrb[0].mxu0 %v298
        %v360 = vpop.f32.mrb[0].mxu0
        %v361 = vadd.f32 %v279, %v360
        %v362 = vpop.f32.mrb[0].mxu0
        %v363 = vpop.f32.mrb[0].mxu0
        %v364 = vadd.f32 %v279, %v363
        %v365 = vpop.f32.mrb[0].mxu0
        %366 = vmatprep.mubr.bf16.mxu0 0
        %367 = vmatmul.mubr.bf16.gmra.mrb[0].mxu0 %v301
        %v368 = vpop.f32.mrb[0].mxu0
        %v369 = vadd.f32 %v279, %v368
        %v370 = vpop.f32.mrb[0].mxu0
        %v371 = vpop.f32.mrb[0].mxu0
        %v372 = vadd.f32 %v279, %v371
        %v373 = vpop.f32.mrb[0].mxu0
        %374 = vmatprep.mubr.bf16.mxu0 0
        %375 = vmatmul.mubr.bf16.gmra.mrb[0].mxu0 %v304
        %v376 = vpop.f32.mrb[0].mxu0
        %v377 = vadd.f32 %v279, %v376
        %v378 = vpop.f32.mrb[0].mxu0
        %v379 = vpop.f32.mrb[0].mxu0
        %v380 = vadd.f32 %v279, %v379
        %v381 = vpop.f32.mrb[0].mxu0
        %382 = vmatprep.mubr.bf16.mxu0 0
        %383 = vmatmul.mubr.bf16.gmra.mrb[0].mxu0 %v307
        %v384 = vpop.f32.mrb[0].mxu0
        %v385 = vadd.f32 %v279, %v384
        %v386 = vpop.f32.mrb[0].mxu0
        %v387 = vpop.f32.mrb[0].mxu0
        %v388 = vadd.f32 %v279, %v387
        %v389 = vpop.f32.mrb[0].mxu0
        %390 = vmatprep.mubr.bf16.mxu0 0
        %391 = vmatmul.mubr.bf16.gmra.mrb[0].mxu0 %v310
        %v392 = vpop.f32.mrb[0].mxu0
        %v393 = vadd.f32 %v279, %v392
        %v394 = vpop.f32.mrb[0].mxu0
        %v395 = vpop.f32.mrb[0].mxu0
        %v396 = vadd.f32 %v279, %v395
        %v397 = vpop.f32.mrb[0].mxu0
        %398 = vmatprep.mubr.bf16.mxu0 0
        %399 = vmatmul.mubr.bf16.gmra.mrb[0].mxu0 %v313
        %v400 = vpop.f32.mrb[0].mxu0
        %v401 = vadd.f32 %v279, %v400
        %v402 = vpop.f32.mrb[0].mxu0
        %v403 = vpop.f32.mrb[0].mxu0
        %v404 = vadd.f32 %v279, %v403
        %v405 = vpop.f32.mrb[0].mxu0
        %406 = vmatprep.mubr.bf16.mxu0 0
        %407 = vmatmul.mubr.bf16.gmra.mrb[0].mxu0 %v316
        %v408 = vpop.f32.mrb[0].mxu0
        %v409 = vadd.f32 %v279, %v408
        %v410 = vpop.f32.mrb[0].mxu0
        %v411 = vpop.f32.mrb[0].mxu0
        %v412 = vadd.f32 %v279, %v411
        %v413 = vpop.f32.mrb[0].mxu0
        %414 = vdwg.mxu0
        %v415 = vmax.f32 %v353, 0.0
        %v416 = vmax.f32 %v356, 0.0
        %v417 = vmax.f32 %v361, 0.0
        %v418 = vmax.f32 %v364, 0.0
        %v419 = vmax.f32 %v369, 0.0
        %v420 = vmax.f32 %v372, 0.0
        %v421 = vmax.f32 %v377, 0.0
        %v422 = vmax.f32 %v380, 0.0
        %v423 = vmax.f32 %v385, 0.0
        %v424 = vmax.f32 %v388, 0.0
        %v425 = vmax.f32 %v393, 0.0
        %v426 = vmax.f32 %v396, 0.0
        %v427 = vmax.f32 %v401, 0.0
        %v428 = vmax.f32 %v404, 0.0
        %v429 = vmax.f32 %v409, 0.0
        %v430 = vmax.f32 %v412, 0.0
        %v431 = vld [vmem:[%s3] sm:$0xf]
        %v432 = vpack.c.bf16 %v416, %v415
        %v433 = vpack.c.bf16 %v418, %v417
        %v434 = vpack.c.bf16 %v420, %v419
        %v435 = vpack.c.bf16 %v422, %v421
        %v436 = vpack.c.bf16 %v424, %v423
        %v437 = vpack.c.bf16 %v426, %v425
        %v438 = vpack.c.bf16 %v428, %v427
        %v439 = vpack.c.bf16 %v430, %v429
        %v440 = vld [vmem:[%s4] sm:$0xff]
        %442 = vset.pattern.permute.xlu0 0
        %443 = vperm.xlu0 %442, %v440
        %v444 = vpop.permute.xlu0 %443
        %446 = vmatprep.subr.bf16.mxu0 0
        %447 = vmatpush1.bf16.xpose.msra.mxu0 %v432
        %448 = vmatprep.subr.bf16.mxu0 0
        %449 = vmatpush1.bf16.xpose.msra.mxu0 %v433
        %450 = vmatprep.subr.bf16.mxu0 0
        %451 = vmatpush1.bf16.xpose.msra.mxu0 %v434
        %452 = vmatprep.subr.bf16.mxu0 0
        %453 = vmatpush1.bf16.xpose.msra.mxu0 %v435
        %454 = vmatprep.subr.bf16.mxu0 0
        %455 = vmatpush1.bf16.xpose.msra.mxu0 %v436
        %456 = vmatprep.subr.bf16.mxu0 0
        %457 = vmatpush1.bf16.xpose.msra.mxu0 %v437
        %458 = vmatprep.subr.bf16.mxu0 0
        %459 = vmatpush1.bf16.xpose.msra.mxu0 %v438
        %460 = vmatprep.subr.bf16.mxu0 0
        %461 = vmatpush1.bf16.xpose.msra.mxu0 %v439
        %462 = vmatprep.subr.bf16.mxu0 0
        %463 = vmatpush1.bf16.xpose.msra.mxu0 0
        %464 = vmatprep.subr.bf16.mxu0 0
        %465 = vmatpush1.bf16.xpose.msra.mxu0 0
        %466 = vmatprep.subr.bf16.mxu0 0
        %467 = vmatpush1.bf16.xpose.msra.mxu0 0
        %468 = vmatprep.subr.bf16.mxu0 0
        %469 = vmatpush1.bf16.xpose.msra.mxu0 0
        %470 = vmatprep.subr.bf16.mxu0 0
        %471 = vmatpush1.bf16.xpose.msra.mxu0 0
        %472 = vmatprep.subr.bf16.mxu0 0
        %473 = vmatpush1.bf16.xpose.msra.mxu0 0
        %474 = vmatprep.subr.bf16.mxu0 0
        %475 = vmatpush1.bf16.xpose.msra.mxu0 0
        %476 = vmatprep.subr.bf16.mxu0 0
        %477 = vmatpush1.bf16.xpose.msra.mxu0 0
        %478 = vmatprep.mubr.bf16.mxu0 0
        %479 = vmatmul.mubr.bf16.gmra.mrb[0].mxu0 %v431
        %v480 = vpop.f32.mrb[0].mxu0
        %v481 = vadd.f32 %v444, %v480
        %v482 = vpop.f32.mrb[0].mxu0
        %v483 = vpop.f32.mrb[0].mxu0
        %v484 = vpop.f32.mrb[0].mxu0
        %485 = vdwg.mxu0
        %v486 = vtanh.pop %v481
        %487 = vst [vmem:[%s230] sm:$0xff] %v486
        %s488 = sand.u32 %s137, 1
        %s489 = scalar_lea.sflag [#allocation3], %s488
        %s490 = sand.u32 %s137, 1
        %s491 = smul.addr %s490, 8
        %s492 = scalar_lea.vmem [#allocation2], %s491
        // Predicated region
        $region41: #{tpu_custom_call.1} parent=39 // pred_check
          %p493 = pneg %p147
        $region42: #{tpu_custom_call.1} parent=39 // pred_check_branch
          %495 = sbr.rel (%p493) target = $region44
        $region43: #{tpu_custom_call.1} parent=39 // pred_region
          %s497 = ssub.s32 128, 128
          %498 = vsyncadd %s489, %s497
          %s499 = smul.addr %s19, 128
          %s500 = scalar_lea.hbm %s5, %s499
          %s502 = sshll.u32 %s492, 4
          %s503 = int_to_ptr.vmem [resolvable:$true] %s502
          %505 = dma.vmem_to_hbm [thread:$0]  %s503, 128, %s500, %s489
        $region44: #{tpu_custom_call.1} parent=39 // pred_fallthru
          _
      $region40: #{tpu_custom_call.1} parent=5 // pred_fallthru
        _
      %p506 = scmp.le.s32.totalorder 2, %s14
      // Predicated region
      $region45: #{tpu_custom_call.1} parent=5 // pred_check
        %p507 = pneg %p506
      $region46: #{tpu_custom_call.1} parent=5 // pred_check_branch
        %509 = sbr.rel (%p507) target = $region48
      $region47: #{tpu_custom_call.1} parent=5 // pred_region
        %s510 = ssub.s32 %s14, 2
        // Predicated region
        $region49: #{tpu_custom_call.1} parent=47 // pred_check
          %p511 = pneg %p153
        $region50: #{tpu_custom_call.1} parent=47 // pred_check_branch
          %513 = sbr.rel (%p511) target = $region52
        $region51: #{tpu_custom_call.1} parent=47 // pred_region
          %s514 = sand.u32 %s138, 1
          %s515 = scalar_lea.sflag [#allocation3], %s514
          %s516 = sand.u32 %s138, 1
          %s517 = smul.addr %s516, 8
          %s518 = scalar_lea.vmem [#allocation2], %s517
          %519 = dma.done %s515, 128
        $region52: #{tpu_custom_call.1} parent=47 // pred_fallthru
          _
      $region48: #{tpu_custom_call.1} parent=5 // pred_fallthru
        _
    $region6: #{tpu_custom_call.1} parent=1 // loop_footer
      %s18 = sadd.s32 1, %s14
    $region7: #{tpu_custom_call.1} parent=1 // loop_footer_branch
      %13 = sbr.rel target = $region3
    $region8: #{tpu_custom_call.1} parent=1 // loop_exit
      _
    %520 = vsyncpa [#allocation3], 1
    %s521 = scalar_lea.sflag [#allocation3], 1
    %522 = vsyncpa %s521, 1

</llo_original>
